<compile_context>
chip_gen: v6e
topology: v6e:2x2x1
jax: 0.10.0
libtpu: 0.0.40
codegen_flags: <defaults>
</compile_context>

<pallas_src>
import functools

import jax
import jax.numpy as jnp
from jax import lax
from jax.experimental import pallas as pl
from jax.experimental.pallas import tpu as pltpu


_RESIDENT_W_BYTES = 4 << 20  # keep the whole weight in VMEM when <= 4 MiB


def _round_up(a: int, m: int) -> int:
    return (a + m - 1) // m * m


def _choose_batch_tiling(B: int, tm_max: int):
    """Pick (B_p, tm) with B_p % tm == 0, minimizing padded rows.

    Guarantees >= 2 batch tiles for moderate batches so the "parallel" grid
    axis can be sharded across both v7x TensorCores.
    """
    if B <= tm_max:
        if B >= 256 and B % 16 == 0:
            return B, B // 2          # two sublane-aligned tiles, zero padding
        return B, B                   # single full-extent tile, zero padding
    B_p = _round_up(B, 8)
    if B_p % tm_max == 0:
        return B_p, tm_max
    # Largest sublane-aligned tile (>=128 rows) that divides B_p: avoids padding
    # the batch all the way up to a tm multiple.
    for t in range(tm_max, 127, -8):
        if B_p % t == 0:
            return B_p, t
    return _round_up(B_p, tm_max), tm_max


def _choose_k_tiling(F_in: int, tk_max: int):
    """Pick (F_in_p, tk, k_steps)."""
    if F_in <= tk_max:
        return F_in, F_in, 1          # single full-extent K block, no padding
    tk_cap = max(128, (tk_max // 128) * 128)
    F_in_p = _round_up(F_in, 128)
    for t in range(tk_cap, 127, -128):
        if F_in_p % t == 0:
            return F_in_p, t, F_in_p // t
    F_in_p = _round_up(F_in_p, tk_cap)          # unreachable safety net
    return F_in_p, tk_cap, F_in_p // tk_cap


def _lr_kernel(x_ref, w_ref, b_ref, o_ref, *, tk, k_steps, w_resident):
    """Grid = (batch tiles, K tiles).  o_ref (f32) is the resident accumulator."""
    k = pl.program_id(1)

    if w_resident and k_steps > 1:
        # Whole weight lives in VMEM; pick this K-step's slice (lane-aligned).
        off = pl.multiple_of(k * tk, 128)
        w_tile = w_ref[:, pl.ds(off, tk)]
    else:
        w_tile = w_ref[...]

    # x tile: (tm, tk); w tile: (F_out_p, tk) -> contract on the shared tk axis
    # (torch nn.Linear layout, no transpose needed).
    part = lax.dot_general(
        x_ref[...], w_tile,
        dimension_numbers=(((1,), (1,)), ((), ())),
        preferred_element_type=jnp.float32,
    )

    if k_steps == 1:
        o_ref[...] = jax.nn.sigmoid(part + b_ref[...])
    else:
        @pl.when(k == 0)
        def _first():
            o_ref[...] = part

        @pl.when(k > 0)
        def _accumulate():
            o_ref[...] += part

        @pl.when(k == k_steps - 1)
        def _finalize():
            o_ref[...] = jax.nn.sigmoid(o_ref[...] + b_ref[...])


def logistic_regression(x, weight, bias, *, tm: int = 1024, tk: int = 1024):
    """x: (B, F_in) f32; weight: (F_out, F_in) f32 (torch layout); bias: (F_out,)."""
    B, F_in = x.shape
    F_out, F_in_w = weight.shape
    assert F_in == F_in_w and bias.shape == (F_out,)

    tm = max(8, (tm // 8) * 8)
    F_out_p = _round_up(F_out, 128)                 # lane-dense output stores
    B_p, tm = _choose_batch_tiling(B, tm)
    F_in_p, tk, k_steps = _choose_k_tiling(F_in, tk)

    w_bytes = F_out_p * F_in_p * 4
    w_resident = (k_steps == 1) or (w_bytes <= _RESIDENT_W_BYTES)
    # TODO(synk): add an F_out (N) grid axis for very large multiclass heads so
    # the streaming weight tile / output block stay within scoped VMEM.

    # ---- zero-pad only when genuinely required (common case: no x copy) -----
    x_in = x if (B_p, F_in_p) == (B, F_in) else jnp.pad(
        x, ((0, B_p - B), (0, F_in_p - F_in)))
    w_in = weight if (F_out_p, F_in_p) == (F_out, F_in) else jnp.pad(
        weight, ((0, F_out_p - F_out), (0, F_in_p - F_in)))
    b_in = (bias if F_out_p == F_out else jnp.pad(bias, (0, F_out_p - F_out))
            ).reshape(1, F_out_p)

    if w_resident:
        # Constant block index -> DMA'd once, reused for every grid step.
        w_spec = pl.BlockSpec((F_out_p, F_in_p), lambda i, k: (0, 0))
    else:
        # Large-F_in fallback: stream (F_out_p, tk) tiles along K.
        w_spec = pl.BlockSpec((F_out_p, tk), lambda i, k: (0, k))

    grid = (B_p // tm, k_steps)
    kernel = functools.partial(
        _lr_kernel, tk=tk, k_steps=k_steps, w_resident=w_resident)

    out_p = pl.pallas_call(
        kernel,
        out_shape=jax.ShapeDtypeStruct((B_p, F_out_p), jnp.float32),
        grid_spec=pltpu.PrefetchScalarGridSpec(
            num_scalar_prefetch=0,
            grid=grid,
            in_specs=[
                pl.BlockSpec((tm, tk), lambda i, k: (i, k)),        # x (streamed)
                w_spec,                                             # weight
                pl.BlockSpec((1, F_out_p), lambda i, k: (0, 0)),    # bias (resident)
            ],
            # Output block index constant along k -> resident f32 accumulator.
            out_specs=pl.BlockSpec((tm, F_out_p), lambda i, k: (i, 0)),
        ),
        compiler_params=pltpu.CompilerParams(
            # Batch tiles independent -> megacore; K reduction stays serial.
            dimension_semantics=("parallel", "arbitrary"),
            # Covers x (8 MiB dbl-buffered @ tm=tk=1024) + resident weight + out
            # on every generation (<= v7x per-TC 64 MiB physical).
            vmem_limit_bytes=32 * 1024 * 1024,
        ),
    )(x_in, w_in, b_in)

    if (B_p, F_out_p) == (B, F_out):
        return out_p
    return out_p[:B, :F_out]


if __name__ == "__main__":
    key = jax.random.PRNGKey(0)

    # ---- small shapes consistent with nn.Linear(inp_features, out_features) --
    B, F_in, F_out = 8, 32, 16
    kx, kw, kb = jax.random.split(key, 3)
    bound = 1.0 / (F_in ** 0.5)
    x = jax.random.normal(kx, (B, F_in), dtype=jnp.float32)
    weight = jax.random.uniform(kw, (F_out, F_in), minval=-bound, maxval=bound,
                                dtype=jnp.float32)
    bias = jax.random.uniform(kb, (F_out,), minval=-bound, maxval=bound,
                              dtype=jnp.float32)

    y = logistic_regression(x, weight, bias)
    jax.block_until_ready(y)
    y_ref = jax.nn.sigmoid(
        jnp.dot(x, weight.T, precision=lax.Precision.HIGHEST) + bias)
    assert y.shape == (B, F_out)
    assert jnp.allclose(y, y_ref, atol=1e-5, rtol=1e-5)

    # ---- second check: exercises multi-K accumulation + resident weight ------
    B2, F_in2, F_out2 = 256, 2304, 10
    k2x, k2w, k2b = jax.random.split(jax.random.PRNGKey(1), 3)
    bound2 = 1.0 / (F_in2 ** 0.5)
    x2 = jax.random.normal(k2x, (B2, F_in2), dtype=jnp.float32)
    w2 = jax.random.uniform(k2w, (F_out2, F_in2), minval=-bound2, maxval=bound2,
                            dtype=jnp.float32)
    b2 = jax.random.uniform(k2b, (F_out2,), minval=-bound2, maxval=bound2,
                            dtype=jnp.float32)

    y2 = logistic_regression(x2, w2, b2)
    jax.block_until_ready(y2)
    y2_ref = jax.nn.sigmoid(
        jnp.dot(x2, w2.T, precision=lax.Precision.HIGHEST) + b2)
    assert y2.shape == (B2, F_out2)
    assert jnp.allclose(y2, y2_ref, atol=1e-4, rtol=1e-4)

    print("KERNEL_OK")
</pallas_src>

<mosaic_0001>
module attributes {stable_mosaic.version = 11 : i64} {
  func.func @_lr_kernel(%arg0: i32, %arg1: i32, %arg2: memref<8x32xf32, #tpu.memory_space<vmem>>, %arg3: memref<128x32xf32, #tpu.memory_space<vmem>>, %arg4: memref<1x128xf32, #tpu.memory_space<vmem>>, %arg5: memref<8x128xf32, #tpu.memory_space<vmem>>) attributes {dimension_semantics = [#tpu.dimension_semantics<parallel>, #tpu.dimension_semantics<arbitrary>], iteration_bounds = array<i64: 1, 1>, scalar_prefetch = 0 : i64, scratch_operands = 0 : i64, tpu.core_type = #tpu.core_type<tc>, window_params = [{transform_indices = @transform_0, window_bounds = array<i64: 8, 32>}, {pipeline_mode = #tpu.pipeline_mode<synchronous>, transform_indices = @transform_1, window_bounds = array<i64: 128, 32>}, {pipeline_mode = #tpu.pipeline_mode<synchronous>, transform_indices = @transform_2, window_bounds = array<i64: 1, 128>}, {transform_indices = @transform_3, window_bounds = array<i64: 8, 128>}]} {
    %c0 = arith.constant 0 : index
    %c0_0 = arith.constant 0 : index
    %0 = vector.load %arg3[%c0, %c0_0] : memref<128x32xf32, #tpu.memory_space<vmem>>, vector<128x32xf32>
    %c0_1 = arith.constant 0 : index
    %c0_2 = arith.constant 0 : index
    %1 = vector.load %arg2[%c0_1, %c0_2] : memref<8x32xf32, #tpu.memory_space<vmem>>, vector<8x32xf32>
    %cst = arith.constant dense<0.000000e+00> : vector<8x128xf32>
    %2 = tpu.matmul %1, %0, %cst {dimension_numbers = #tpu.dot_dimension_numbers<[1], [1], [0], [0], [0, 0, 1, 0], [], []>} : vector<8x32xf32>, vector<128x32xf32>, vector<8x128xf32> -> vector<8x128xf32>
    %c0_3 = arith.constant 0 : index
    %c0_4 = arith.constant 0 : index
    %3 = vector.load %arg4[%c0_3, %c0_4] : memref<1x128xf32, #tpu.memory_space<vmem>>, vector<1x128xf32>
    %4 = vector.broadcast %3 : vector<1x128xf32> to vector<8x128xf32>
    %5 = arith.addf %2, %4 : vector<8x128xf32>
    %6 = arith.negf %5 : vector<8x128xf32>
    %7 = math.exp %6 : vector<8x128xf32>
    %cst_5 = arith.constant 1.000000e+00 : f32
    %8 = vector.broadcast %cst_5 : f32 to vector<8x128xf32>
    %9 = arith.addf %8, %7 : vector<8x128xf32>
    %10 = arith.divf %8, %9 : vector<8x128xf32>
    %c0_6 = arith.constant 0 : index
    %c0_7 = arith.constant 0 : index
    %11 = vector.load %arg5[%c0_6, %c0_7] : memref<8x128xf32, #tpu.memory_space<vmem>>, vector<8x128xf32>
    tpu.vector_store %arg5[%c0_6, %c0_7], %10 {strides = array<i32>} : memref<8x128xf32, #tpu.memory_space<vmem>>, vector<8x128xf32>,
    return
  }
  func.func @transform_0(%arg0: i32, %arg1: i32) -> (i32, i32) {
    %c0_i32 = arith.constant 0 : i32
    return %arg0, %arg1 : i32, i32
  }
  func.func @transform_1(%arg0: i32, %arg1: i32) -> (i32, i32) {
    %c0_i32 = arith.constant 0 : i32
    %c0_i32_0 = arith.constant 0 : i32
    %c0_i32_1 = arith.constant 0 : i32
    return %c0_i32, %c0_i32_0 : i32, i32
  }
  func.func @transform_2(%arg0: i32, %arg1: i32) -> (i32, i32) {
    %c0_i32 = arith.constant 0 : i32
    %c0_i32_0 = arith.constant 0 : i32
    %c0_i32_1 = arith.constant 0 : i32
    return %c0_i32, %c0_i32_0 : i32, i32
  }
  func.func @transform_3(%arg0: i32, %arg1: i32) -> (i32, i32) {
    %c0_i32 = arith.constant 0 : i32
    %c0_i32_0 = arith.constant 0 : i32
    return %arg0, %c0_i32 : i32, i32
  }
}

</mosaic_0001>

<llo_original>
// kernel: tpu_custom_call.1
$region0: #{tpu_custom_call.1}
  #allocation0 [shape = 'u32[]', space=smem, size = 0x4, offset = 0x4, fixed_abs, tag = 'smem constant byte address 0x4 - core index']
  #allocation1 [shape = 'u32[144,128]{1,0:T(1,128)}', space=vmem, size = 0x12000, scoped, tag = 'internal scratch']
  %s0 = inlined_call_operand.vmem [shape: f32[8,32], index: 0, kind: input, shape index: {}]
  %s1 = inlined_call_operand.vmem [shape: f32[128,32], index: 1, kind: input, shape index: {}]
  %s2 = inlined_call_operand.vmem [shape: f32[1,128], index: 2, kind: input, shape index: {}]
  %s3 = inlined_call_operand.hbm [shape: f32[8,128], index: 3, kind: output, shape index: {}]
  %s4 = sld [smem:[#allocation0]]
  $region22: #{tpu_custom_call.1} parent=0
    _
  %s6 = ssub.s32 1, %s4
  %s7 = scalar_select 0, %s6, %s4
  $region1: #{tpu_custom_call.1} parent=0
    #allocation2 [shape = 'u8[4096]{0}', space=vmem, size = 0x1000, scoped, tag = 'output window, operand 0, single buffered']
    #allocation3 [shape = 's32[1]{0}', space=sflag, size = 0x4, scoped, tag = 'scoped memory for tpu_custom_call.1']
    %8 = vsyncpa [#allocation3], 0
    // Predicated region
    $region2: #{tpu_custom_call.1} parent=1 // pred_check
      _
    $region3: #{tpu_custom_call.1} parent=1 // pred_check_branch
      %10 = sbr.rel (0) target = $region5
    $region4: #{tpu_custom_call.1} parent=1 // pred_region
      _
    $region5: #{tpu_custom_call.1} parent=1 // pred_fallthru
      _
    // Predicated region
    $region6: #{tpu_custom_call.1} parent=1 // pred_check
      _
    $region7: #{tpu_custom_call.1} parent=1 // pred_check_branch
      %12 = sbr.rel (0) target = $region9
    $region8: #{tpu_custom_call.1} parent=1 // pred_region
      _
    $region9: #{tpu_custom_call.1} parent=1 // pred_fallthru
      _
    // Predicated region
    $region10: #{tpu_custom_call.1} parent=1 // pred_check
      _
    $region11: #{tpu_custom_call.1} parent=1 // pred_check_branch
      %14 = sbr.rel (0) target = $region13
    $region12: #{tpu_custom_call.1} parent=1 // pred_region
      _
    $region13: #{tpu_custom_call.1} parent=1 // pred_fallthru
      _
    %v15 = vld [vmem:[%s1] sm:$0xff]
    %v16 = vld [vmem:[%s1 + $0x8] sm:$0xff]
    %v17 = vld [vmem:[%s1 + $0x10] sm:$0xff]
    %v18 = vld [vmem:[%s1 + $0x18] sm:$0xff]
    %v19 = vld [vmem:[%s1 + $0x20] sm:$0xff]
    %v20 = vld [vmem:[%s1 + $0x28] sm:$0xff]
    %v21 = vld [vmem:[%s1 + $0x30] sm:$0xff]
    %v22 = vld [vmem:[%s1 + $0x38] sm:$0xff]
    %v23 = vld [vmem:[%s1 + $0x40] sm:$0xff]
    %v24 = vld [vmem:[%s1 + $0x48] sm:$0xff]
    %v25 = vld [vmem:[%s1 + $0x50] sm:$0xff]
    %v26 = vld [vmem:[%s1 + $0x58] sm:$0xff]
    %v27 = vld [vmem:[%s1 + $0x60] sm:$0xff]
    %v28 = vld [vmem:[%s1 + $0x68] sm:$0xff]
    %v29 = vld [vmem:[%s1 + $0x70] sm:$0xff]
    %v30 = vld [vmem:[%s1 + $0x78] sm:$0xff]
    %v31 = vld [vmem:[%s0] sm:$0xff]
    %v32 = vld [vmem:[%s2] sm:$0x1]
    %v34 = vlaneseq
    %v35 = vshrl.u32 %v34, 7
    %v36 = vsub.s32 0, %v35
    %v37 = vrot.slane %v32, %v36
    %vm39 = vcmask 261120
    %v41 = vsel %vm39, %v31, 0
    %v44 = vsel %vm39, %v15, 0
    %v47 = vsel %vm39, %v16, 0
    %v50 = vsel %vm39, %v17, 0
    %v53 = vsel %vm39, %v18, 0
    %v56 = vsel %vm39, %v19, 0
    %v59 = vsel %vm39, %v20, 0
    %v62 = vsel %vm39, %v21, 0
    %v65 = vsel %vm39, %v22, 0
    %v68 = vsel %vm39, %v23, 0
    %v71 = vsel %vm39, %v24, 0
    %v74 = vsel %vm39, %v25, 0
    %v77 = vsel %vm39, %v26, 0
    %v80 = vsel %vm39, %v27, 0
    %v83 = vsel %vm39, %v28, 0
    %v86 = vsel %vm39, %v29, 0
    %v89 = vsel %vm39, %v30, 0
    %91 = vmatprep.subr.mxu0 0.0
    %92 = vmatpush1.xpose.msra.mxu0 %v89
    %93 = vmatprep.subr.mxu0 0.0
    %94 = vmatpush1.xpose.msra.mxu0 %v86
    %95 = vmatprep.subr.mxu0 0.0
    %96 = vmatpush1.xpose.msra.mxu0 %v83
    %97 = vmatprep.subr.mxu0 0.0
    %98 = vmatpush1.xpose.msra.mxu0 %v80
    %99 = vmatprep.subr.mxu0 0.0
    %100 = vmatpush1.xpose.msra.mxu0 %v77
    %101 = vmatprep.subr.mxu0 0.0
    %102 = vmatpush1.xpose.msra.mxu0 %v74
    %103 = vmatprep.subr.mxu0 0.0
    %104 = vmatpush1.xpose.msra.mxu0 %v71
    %105 = vmatprep.subr.mxu0 0.0
    %106 = vmatpush1.xpose.msra.mxu0 %v68
    %107 = vmatprep.subr.mxu0 0.0
    %108 = vmatpush1.xpose.msra.mxu0 %v65
    %109 = vmatprep.subr.mxu0 0.0
    %110 = vmatpush1.xpose.msra.mxu0 %v62
    %111 = vmatprep.subr.mxu0 0.0
    %112 = vmatpush1.xpose.msra.mxu0 %v59
    %113 = vmatprep.subr.mxu0 0.0
    %114 = vmatpush1.xpose.msra.mxu0 %v56
    %115 = vmatprep.subr.mxu0 0.0
    %116 = vmatpush1.xpose.msra.mxu0 %v53
    %117 = vmatprep.subr.mxu0 0.0
    %118 = vmatpush1.xpose.msra.mxu0 %v50
    %119 = vmatprep.subr.mxu0 0.0
    %120 = vmatpush1.xpose.msra.mxu0 %v47
    %121 = vmatprep.subr.mxu0 0.0
    %122 = vmatpush1.xpose.msra.mxu0 %v44
    %123 = vmatprep.subr.mxu0 0.0
    %124 = vmatpush2.xpose.msra.mxu0 0.0
    %125 = vmatprep.subr.mxu0 0.0
    %126 = vmatpush2.xpose.msra.mxu0 0.0
    %127 = vmatprep.subr.mxu0 0.0
    %128 = vmatpush2.xpose.msra.mxu0 0.0
    %129 = vmatprep.subr.mxu0 0.0
    %130 = vmatpush2.xpose.msra.mxu0 0.0
    %131 = vmatprep.subr.mxu0 0.0
    %132 = vmatpush2.xpose.msra.mxu0 0.0
    %133 = vmatprep.subr.mxu0 0.0
    %134 = vmatpush2.xpose.msra.mxu0 0.0
    %135 = vmatprep.subr.mxu0 0.0
    %136 = vmatpush2.xpose.msra.mxu0 0.0
    %137 = vmatprep.subr.mxu0 0.0
    %138 = vmatpush2.xpose.msra.mxu0 0.0
    %139 = vmatprep.subr.mxu0 0.0
    %140 = vmatpush2.xpose.msra.mxu0 0.0
    %141 = vmatprep.subr.mxu0 0.0
    %142 = vmatpush2.xpose.msra.mxu0 0.0
    %143 = vmatprep.subr.mxu0 0.0
    %144 = vmatpush2.xpose.msra.mxu0 0.0
    %145 = vmatprep.subr.mxu0 0.0
    %146 = vmatpush2.xpose.msra.mxu0 0.0
    %147 = vmatprep.subr.mxu0 0.0
    %148 = vmatpush2.xpose.msra.mxu0 0.0
    %149 = vmatprep.subr.mxu0 0.0
    %150 = vmatpush2.xpose.msra.mxu0 0.0
    %151 = vmatprep.subr.mxu0 0.0
    %152 = vmatpush2.xpose.msra.mxu0 0.0
    %153 = vmatprep.subr.mxu0 0.0
    %154 = vmatpush2.xpose.msra.mxu0 0.0
    %155 = vmatprep.mubr.f32.mxu0 0.0
    %156 = vmatmul.mubr.f32.gmra.mxu0 %v41
    %v157 = vpop.f32.mrf.mxu0
    %v158 = vadd.f32 %v37, %v157
    %v159 = vpop.f32.mrf.mxu0
    %160 = vdwg.mxu0
    %v161 = vxor.u32 %v158, 2147483648
    %v162 = vmul.f32 %v161, 1.442695
    %v163 = vpow.pop %v162
    %v164 = vadd.f32 %v163, 1.0
    %v165 = vrcp.pop %v164
    %v166 = vmul.f32 1.0, %v165
    %167 = vst [vmem:[#allocation2] sm:$0xff] %v166
    // Predicated region
    $region14: #{tpu_custom_call.1} parent=1 // pred_check
      _
    $region15: #{tpu_custom_call.1} parent=1 // pred_check_branch
      %169 = sbr.rel (0) target = $region17
    $region16: #{tpu_custom_call.1} parent=1 // pred_region
      %s171 = ssub.s32 128, 128
      %172 = vsyncadd [#allocation3], %s171
      %s174 = sshll.u32 [#allocation2], 4
      %s175 = int_to_ptr.vmem [resolvable:$true] %s174
      %177 = dma.vmem_to_hbm [thread:$0]  %s175, 128, %s3, [#allocation3]
    $region17: #{tpu_custom_call.1} parent=1 // pred_fallthru
      _
    // Predicated region
    $region18: #{tpu_custom_call.1} parent=1 // pred_check
      _
    $region19: #{tpu_custom_call.1} parent=1 // pred_check_branch
      %179 = sbr.rel (0) target = $region21
    $region20: #{tpu_custom_call.1} parent=1 // pred_region
      %180 = dma.done [#allocation3], 128
    $region21: #{tpu_custom_call.1} parent=1 // pred_fallthru
      _
    %181 = vsyncpa [#allocation3], 1

</llo_original>
